<compile_context>
chip_gen: v6e
topology: v6e:2x2x1
jax: 0.10.0
libtpu: 0.0.40
codegen_flags: <defaults>
</compile_context>

<pallas_src>
import functools
import numpy as np
import jax
import jax.numpy as jnp
from jax.experimental import pallas as pl
from jax.experimental.pallas import tpu as pltpu

BN_EPS = 1e-5
F_PAD = 128      # padded hidden/output lane width; requires hid_dim, out_dim <= 128
MAX_TB = 2048    # max batch-tile rows (VMEM use stays ~a few MiB, fine on v7x's 64 MiB)


def mlp_kernel(x_ref, w_in_ref, w_hid_ref, b_ref, o_ref):
    """(Linear -> Tanh) x3 -> Linear, BN pre-folded into the following Linear.

    x_ref:     (TB, in_dim)    f32   (streams per grid step)
    w_in_ref:  (in_dim, 128)   bf16  (resident)
    w_hid_ref: (3, 128, 128)   bf16  (resident)
    b_ref:     (4, 1, 128)     f32   (resident)
    o_ref:     (TB, out_dim)   f32
    Padded lanes carry zeros end-to-end (zero weight cols/rows, zero bias pad,
    tanh(0)=0), so only the first out_dim lanes of the final dot are stored.
    """
    x = x_ref[...].astype(jnp.bfloat16)
    h = jnp.dot(x, w_in_ref[...], preferred_element_type=jnp.float32) + b_ref[0]
    h = jnp.tanh(h.astype(jnp.bfloat16))
    h = jnp.dot(h, w_hid_ref[0], preferred_element_type=jnp.float32) + b_ref[1]
    h = jnp.tanh(h.astype(jnp.bfloat16))
    # Dropout(0.5) layers are identity in inference mode.
    h = jnp.dot(h, w_hid_ref[1], preferred_element_type=jnp.float32) + b_ref[2]
    h = jnp.tanh(h.astype(jnp.bfloat16))
    out = jnp.dot(h, w_hid_ref[2], preferred_element_type=jnp.float32) + b_ref[3]
    o_ref[...] = out[:, : o_ref.shape[1]]   # store only the valid output lanes


def _round_up(n, m):
    return ((n + m - 1) // m) * m


def _choose_tiles(batch):
    """Balanced batch tiling: >=2 even tiles when there is enough work (so both
    v7x TensorCores are used), tile rows a multiple of 8, no tile mostly padding."""
    b8 = _round_up(max(batch, 1), 8)
    num_tiles = pl.cdiv(b8, MAX_TB)
    if b8 >= 16:
        num_tiles = max(num_tiles, 2)
    if num_tiles > 1 and num_tiles % 2:
        num_tiles += 1
    tb = _round_up(pl.cdiv(b8, num_tiles), 8)
    return num_tiles, tb


def prepare_params(params):
    """Fold inference-mode BatchNorms into the following Linear, then pad and
    pack into bf16 weight slabs + f32 bias slab.  Call ONCE and reuse."""
    (w1, b1, g1, be1, m1, v1,
     w2, b2, g2, be2, m2, v2,
     w3, b3, g3, be3, m3, v3,
     w4, b4) = params

    def bn_fold(g, be, m, v):
        scale = g * jax.lax.rsqrt(v + BN_EPS)   # (1, h)
        shift = be - m * scale                  # (1, h)
        return scale, shift

    s1, t1 = bn_fold(g1, be1, m1, v1)
    s2, t2 = bn_fold(g2, be2, m2, v2)
    s3, t3 = bn_fold(g3, be3, m3, v3)

    # (h*s + t) @ W + b  ==  h @ (s^T * W) + (t @ W + b)
    ws = [w1, s1.T * w2, s2.T * w3, s3.T * w4]
    bs = [b1, b2 + t1 @ w2, b3 + t2 @ w3, b4 + t3 @ w4]

    in_dim, hid_dim = w1.shape
    out_dim = w4.shape[1]
    assert hid_dim <= F_PAD and out_dim <= F_PAD

    def padw(w):
        return jnp.pad(w, ((0, F_PAD - w.shape[0]), (0, F_PAD - w.shape[1])))

    def padb(b):
        return jnp.pad(b, ((0, 0), (0, F_PAD - b.shape[1])))

    # First-layer weight keeps its true input width (x is NOT lane-padded);
    # only its output dim is padded to 128 lanes.
    w_in = jnp.pad(ws[0], ((0, 0), (0, F_PAD - hid_dim))).astype(jnp.bfloat16)   # (in_dim, 128)
    w_hid = jnp.stack([padw(w) for w in ws[1:]]).astype(jnp.bfloat16)            # (3, 128, 128)
    bias = jnp.stack([padb(b) for b in bs]).astype(jnp.float32)                  # (4, 1, 128)
    return w_in, w_hid, bias, out_dim


def mlp_forward(x, prepared):
    """x: (B, in_dim). prepared: output of prepare_params (computed once)."""
    w_in, w_hid, bias, out_dim = prepared
    B, in_dim = x.shape
    assert in_dim == w_in.shape[0]

    num_tiles, tb = _choose_tiles(B)
    b_pad = num_tiles * tb

    xp = x.astype(jnp.float32)
    if b_pad != B:
        xp = jnp.pad(xp, ((0, b_pad - B), (0, 0)))   # batch pad only; no feature pad

    out = pl.pallas_call(
        mlp_kernel,
        out_shape=jax.ShapeDtypeStruct((b_pad, out_dim), jnp.float32),
        grid_spec=pltpu.PrefetchScalarGridSpec(
            num_scalar_prefetch=0,
            grid=(num_tiles,),
            in_specs=[
                pl.BlockSpec((tb, in_dim), lambda i: (i, 0)),          # x tile (streams)
                pl.BlockSpec((in_dim, F_PAD), lambda i: (0, 0)),       # W_in   (resident)
                pl.BlockSpec((3, F_PAD, F_PAD), lambda i: (0, 0, 0)),  # W_hid  (resident)
                pl.BlockSpec((4, 1, F_PAD), lambda i: (0, 0, 0)),      # biases (resident)
            ],
            out_specs=pl.BlockSpec((tb, out_dim), lambda i: (i, 0)),   # narrow, valid lanes only
        ),
        compiler_params=pltpu.CompilerParams(
            dimension_semantics=("parallel",),   # batch tiles -> both TCs on v7x
            vmem_limit_bytes=32 * 1024 * 1024,   # a few MiB actually used at tb=2048
        ),
    )(xp, w_in, w_hid, bias)
    return out[:B]


def init_params(key, in_dim, hid_dim=64, out_dim=2):
    """Deterministic synthetic parameters matching the PyTorch module's shapes.
    Weights are stored pre-transposed as (in_features, out_features)."""
    dims = [(in_dim, hid_dim), (hid_dim, hid_dim), (hid_dim, hid_dim), (hid_dim, out_dim)]
    params = []
    keys = jax.random.split(key, 16)
    ki = 0
    for li, (din, dout) in enumerate(dims):
        bound = 1.0 / np.sqrt(din)
        w = jax.random.uniform(keys[ki], (din, dout), jnp.float32, -bound, bound); ki += 1
        b = jax.random.uniform(keys[ki], (1, dout), jnp.float32, -bound, bound); ki += 1
        params += [w, b]
        if li < 3:  # BatchNorm1d after the first three linears
            gamma = jnp.ones((1, dout), jnp.float32)
            beta = jnp.zeros((1, dout), jnp.float32)
            mean = 0.05 * jax.random.normal(keys[ki], (1, dout), jnp.float32); ki += 1
            var = jnp.ones((1, dout), jnp.float32) + 0.1 * jax.random.uniform(
                keys[ki], (1, dout), jnp.float32); ki += 1
            params += [gamma, beta, mean, var]
    return tuple(params)


def mlp_reference(x, params):
    """Pure-JAX f32 reference of the same inference-mode forward (BN NOT folded,
    so it also validates the fold math)."""
    (w1, b1, g1, be1, m1, v1,
     w2, b2, g2, be2, m2, v2,
     w3, b3, g3, be3, m3, v3,
     w4, b4) = params

    def block(h, w, b, g, be, m, v):
        h = jnp.tanh(h @ w + b)
        return (h - m) / jnp.sqrt(v + BN_EPS) * g + be

    h = block(x, w1, b1, g1, be1, m1, v1)
    h = block(h, w2, b2, g2, be2, m2, v2)
    h = block(h, w3, b3, g3, be3, m3, v3)
    return h @ w4 + b4


if __name__ == "__main__":
    key = jax.random.PRNGKey(0)
    k_x, k_p, k_x2 = jax.random.split(key, 3)

    B, IN_DIM, HID_DIM, OUT_DIM = 8, 32, 64, 2
    params = init_params(k_p, IN_DIM, HID_DIM, OUT_DIM)
    prepared = prepare_params(params)   # hoisted: BN fold / pack done once, reused

    # Small single-tile case.
    x = jax.random.normal(k_x, (B, IN_DIM), jnp.float32)
    out = jax.block_until_ready(mlp_forward(x, prepared))
    ref = mlp_reference(x, params)
    # bf16 MXU operands => ~1e-2-level relative error vs the pure f32 reference.
    np.testing.assert_allclose(np.asarray(out), np.asarray(ref), rtol=5e-2, atol=5e-2)

    # Awkward batch size: exercises the balanced >=2-tile "parallel" grid path.
    x2 = jax.random.normal(k_x2, (300, IN_DIM), jnp.float32)
    out2 = jax.block_until_ready(mlp_forward(x2, prepared))
    ref2 = mlp_reference(x2, params)
    np.testing.assert_allclose(np.asarray(out2), np.asarray(ref2), rtol=5e-2, atol=5e-2)

    print("KERNEL_OK")
</pallas_src>

<mosaic_0001>
module attributes {stable_mosaic.version = 11 : i64} {
  func.func @mlp_kernel(%arg0: i32, %arg1: memref<8x32xf32, #tpu.memory_space<vmem>>, %arg2: memref<32x128xbf16, #tpu.memory_space<vmem>>, %arg3: memref<3x128x128xbf16, #tpu.memory_space<vmem>>, %arg4: memref<4x1x128xf32, #tpu.memory_space<vmem>>, %arg5: memref<8x2xf32, #tpu.memory_space<vmem>>) attributes {dimension_semantics = [#tpu.dimension_semantics<parallel>], iteration_bounds = array<i64: 1>, scalar_prefetch = 0 : i64, scratch_operands = 0 : i64, tpu.core_type = #tpu.core_type<tc>, window_params = [{transform_indices = @transform_0, window_bounds = array<i64: 8, 32>}, {pipeline_mode = #tpu.pipeline_mode<synchronous>, transform_indices = @transform_1, window_bounds = array<i64: 32, 128>}, {pipeline_mode = #tpu.pipeline_mode<synchronous>, transform_indices = @transform_2, window_bounds = array<i64: 3, 128, 128>}, {pipeline_mode = #tpu.pipeline_mode<synchronous>, transform_indices = @transform_3, window_bounds = array<i64: 4, 1, 128>}, {transform_indices = @transform_4, window_bounds = array<i64: 8, 2>}]} {
    %c0 = arith.constant 0 : index
    %c0_0 = arith.constant 0 : index
    %0 = vector.load %arg1[%c0, %c0_0] : memref<8x32xf32, #tpu.memory_space<vmem>>, vector<8x32xf32>
    %1 = arith.truncf %0 : vector<8x32xf32> to vector<8x32xbf16>
    %c0_1 = arith.constant 0 : index
    %c0_2 = arith.constant 0 : index
    %2 = vector.load %arg2[%c0_1, %c0_2] : memref<32x128xbf16, #tpu.memory_space<vmem>>, vector<32x128xbf16>
    %cst = arith.constant dense<0.000000e+00> : vector<8x128xf32>
    %3 = tpu.matmul %1, %2, %cst {dimension_numbers = #tpu.dot_dimension_numbers<[1], [0], [0], [1], [0, 0, 1, 1], [], []>} : vector<8x32xbf16>, vector<32x128xbf16>, vector<8x128xf32> -> vector<8x128xf32>
    %c0_3 = arith.constant 0 : index
    %c0_4 = arith.constant 0 : index
    %c0_5 = arith.constant 0 : index
    %4 = vector.load %arg4[%c0_3, %c0_4, %c0_5] : memref<4x1x128xf32, #tpu.memory_space<vmem>>, vector<1x1x128xf32>
    %5 = vector.shape_cast %4 : vector<1x1x128xf32> to vector<1x128xf32>
    %6 = vector.broadcast %5 : vector<1x128xf32> to vector<8x128xf32>
    %7 = arith.addf %3, %6 : vector<8x128xf32>
    %8 = arith.truncf %7 : vector<8x128xf32> to vector<8x128xbf16>
    %9 = math.tanh %8 : vector<8x128xbf16>
    %c0_6 = arith.constant 0 : index
    %c0_7 = arith.constant 0 : index
    %c0_8 = arith.constant 0 : index
    %10 = vector.load %arg3[%c0_6, %c0_7, %c0_8] : memref<3x128x128xbf16, #tpu.memory_space<vmem>>, vector<1x128x128xbf16>
    %11 = vector.shape_cast %10 : vector<1x128x128xbf16> to vector<128x128xbf16>
    %cst_9 = arith.constant dense<0.000000e+00> : vector<8x128xf32>
    %12 = tpu.matmul %9, %11, %cst_9 {dimension_numbers = #tpu.dot_dimension_numbers<[1], [0], [0], [1], [0, 0, 1, 1], [], []>} : vector<8x128xbf16>, vector<128x128xbf16>, vector<8x128xf32> -> vector<8x128xf32>
    %c1 = arith.constant 1 : index
    %c0_10 = arith.constant 0 : index
    %c0_11 = arith.constant 0 : index
    %13 = vector.load %arg4[%c1, %c0_10, %c0_11] : memref<4x1x128xf32, #tpu.memory_space<vmem>>, vector<1x1x128xf32>
    %14 = vector.shape_cast %13 : vector<1x1x128xf32> to vector<1x128xf32>
    %15 = vector.broadcast %14 : vector<1x128xf32> to vector<8x128xf32>
    %16 = arith.addf %12, %15 : vector<8x128xf32>
    %17 = arith.truncf %16 : vector<8x128xf32> to vector<8x128xbf16>
    %18 = math.tanh %17 : vector<8x128xbf16>
    %c1_12 = arith.constant 1 : index
    %c0_13 = arith.constant 0 : index
    %c0_14 = arith.constant 0 : index
    %19 = vector.load %arg3[%c1_12, %c0_13, %c0_14] : memref<3x128x128xbf16, #tpu.memory_space<vmem>>, vector<1x128x128xbf16>
    %20 = vector.shape_cast %19 : vector<1x128x128xbf16> to vector<128x128xbf16>
    %cst_15 = arith.constant dense<0.000000e+00> : vector<8x128xf32>
    %21 = tpu.matmul %18, %20, %cst_15 {dimension_numbers = #tpu.dot_dimension_numbers<[1], [0], [0], [1], [0, 0, 1, 1], [], []>} : vector<8x128xbf16>, vector<128x128xbf16>, vector<8x128xf32> -> vector<8x128xf32>
    %c2 = arith.constant 2 : index
    %c0_16 = arith.constant 0 : index
    %c0_17 = arith.constant 0 : index
    %22 = vector.load %arg4[%c2, %c0_16, %c0_17] : memref<4x1x128xf32, #tpu.memory_space<vmem>>, vector<1x1x128xf32>
    %23 = vector.shape_cast %22 : vector<1x1x128xf32> to vector<1x128xf32>
    %24 = vector.broadcast %23 : vector<1x128xf32> to vector<8x128xf32>
    %25 = arith.addf %21, %24 : vector<8x128xf32>
    %26 = arith.truncf %25 : vector<8x128xf32> to vector<8x128xbf16>
    %27 = math.tanh %26 : vector<8x128xbf16>
    %c2_18 = arith.constant 2 : index
    %c0_19 = arith.constant 0 : index
    %c0_20 = arith.constant 0 : index
    %28 = vector.load %arg3[%c2_18, %c0_19, %c0_20] : memref<3x128x128xbf16, #tpu.memory_space<vmem>>, vector<1x128x128xbf16>
    %29 = vector.shape_cast %28 : vector<1x128x128xbf16> to vector<128x128xbf16>
    %cst_21 = arith.constant dense<0.000000e+00> : vector<8x128xf32>
    %30 = tpu.matmul %27, %29, %cst_21 {dimension_numbers = #tpu.dot_dimension_numbers<[1], [0], [0], [1], [0, 0, 1, 1], [], []>} : vector<8x128xbf16>, vector<128x128xbf16>, vector<8x128xf32> -> vector<8x128xf32>
    %c3 = arith.constant 3 : index
    %c0_22 = arith.constant 0 : index
    %c0_23 = arith.constant 0 : index
    %31 = vector.load %arg4[%c3, %c0_22, %c0_23] : memref<4x1x128xf32, #tpu.memory_space<vmem>>, vector<1x1x128xf32>
    %32 = vector.shape_cast %31 : vector<1x1x128xf32> to vector<1x128xf32>
    %33 = vector.broadcast %32 : vector<1x128xf32> to vector<8x128xf32>
    %34 = arith.addf %30, %33 : vector<8x128xf32>
    %35 = vector.extract_strided_slice %34 {offsets = [0, 0], sizes = [8, 2], strides = [1, 1]} : vector<8x128xf32> to vector<8x2xf32>
    %c0_24 = arith.constant 0 : index
    %c0_25 = arith.constant 0 : index
    %36 = vector.load %arg5[%c0_24, %c0_25] : memref<8x2xf32, #tpu.memory_space<vmem>>, vector<8x2xf32>
    tpu.vector_store %arg5[%c0_24, %c0_25], %35 {strides = array<i32>} : memref<8x2xf32, #tpu.memory_space<vmem>>, vector<8x2xf32>,
    return
  }
  func.func @transform_0(%arg0: i32) -> (i32, i32) {
    %c0_i32 = arith.constant 0 : i32
    %c0_i32_0 = arith.constant 0 : i32
    return %arg0, %c0_i32 : i32, i32
  }
  func.func @transform_1(%arg0: i32) -> (i32, i32) {
    %c0_i32 = arith.constant 0 : i32
    %c0_i32_0 = arith.constant 0 : i32
    %c0_i32_1 = arith.constant 0 : i32
    return %c0_i32, %c0_i32_0 : i32, i32
  }
  func.func @transform_2(%arg0: i32) -> (i32, i32, i32) {
    %c0_i32 = arith.constant 0 : i32
    %c0_i32_0 = arith.constant 0 : i32
    %c0_i32_1 = arith.constant 0 : i32
    %c0_i32_2 = arith.constant 0 : i32
    return %c0_i32, %c0_i32_0, %c0_i32_1 : i32, i32, i32
  }
  func.func @transform_3(%arg0: i32) -> (i32, i32, i32) {
    %c0_i32 = arith.constant 0 : i32
    %c0_i32_0 = arith.constant 0 : i32
    %c0_i32_1 = arith.constant 0 : i32
    %c0_i32_2 = arith.constant 0 : i32
    return %c0_i32, %c0_i32_0, %c0_i32_1 : i32, i32, i32
  }
  func.func @transform_4(%arg0: i32) -> (i32, i32) {
    %c0_i32 = arith.constant 0 : i32
    %c0_i32_0 = arith.constant 0 : i32
    return %arg0, %c0_i32 : i32, i32
  }
}

</mosaic_0001>

<llo_original>
// kernel: tpu_custom_call.1
$region0: #{tpu_custom_call.1}
  #allocation0 [shape = 'u32[]', space=smem, size = 0x4, offset = 0x4, fixed_abs, tag = 'smem constant byte address 0x4 - core index']
  #allocation1 [shape = 'u32[144,128]{1,0:T(1,128)}', space=vmem, size = 0x12000, scoped, tag = 'internal scratch']
  %s0 = inlined_call_operand.hbm [shape: f32[8,32], index: 0, kind: input, shape index: {}]
  %s1 = inlined_call_operand.hbm [shape: bf16[32,128], index: 1, kind: input, shape index: {}]
  %s2 = inlined_call_operand.hbm [shape: bf16[3,128,128], index: 2, kind: input, shape index: {}]
  %s3 = inlined_call_operand.vmem [shape: f32[4,1,128], index: 3, kind: input, shape index: {}]
  %s4 = inlined_call_operand.vmem [shape: f32[8,2], index: 4, kind: output, shape index: {}]
  %s5 = sld [smem:[#allocation0]]
  $region38: #{tpu_custom_call.1} parent=0
    _
  %s7 = ssub.s32 1, %s5
  %s8 = scalar_select 0, %s7, %s5
  $region1: #{tpu_custom_call.1} parent=0
    #allocation2 [shape = 'u8[4096]{0}', space=vmem, size = 0x1000, scoped, tag = 'input window, operand 0, single buffered']
    #allocation3 [shape = 's32[1]{0}', space=sflag, size = 0x4, scoped, tag = 'scoped memory for tpu_custom_call.1']
    #allocation4 [shape = 'u8[8192]{0}', space=vmem, size = 0x2000, scoped, tag = 'input window, operand 1, single buffered']
    #allocation5 [shape = 's32[1]{0}', space=sflag, size = 0x4, scoped, tag = 'scoped memory for tpu_custom_call.1']
    #allocation6 [shape = 'u8[98304]{0}', space=vmem, size = 0x18000, scoped, tag = 'input window, operand 2, single buffered']
    %9 = vsyncpa [#allocation3], 0
    %10 = vsyncpa [#allocation5], 0
    // Predicated region
    $region2: #{tpu_custom_call.1} parent=1 // pred_check
      _
    $region3: #{tpu_custom_call.1} parent=1 // pred_check_branch
      %12 = sbr.rel (0) target = $region5
    $region4: #{tpu_custom_call.1} parent=1 // pred_region
      %s14 = ssub.s32 128, 128
      %15 = vsyncadd [#allocation3], %s14
      %s17 = sshll.u32 [#allocation2], 4
      %s18 = int_to_ptr.vmem [resolvable:$true] %s17
      %20 = dma.hbm_to_vmem [thread:$0]  %s0, 128, %s18, [#allocation3]
    $region5: #{tpu_custom_call.1} parent=1 // pred_fallthru
      _
    // Predicated region
    $region6: #{tpu_custom_call.1} parent=1 // pred_check
      _
    $region7: #{tpu_custom_call.1} parent=1 // pred_check_branch
      %22 = sbr.rel (0) target = $region9
    $region8: #{tpu_custom_call.1} parent=1 // pred_region
      %s24 = ssub.s32 256, 256
      %25 = vsyncadd [#allocation5], %s24
      %s26 = sshll.u32 [#allocation4], 4
      %s27 = int_to_ptr.vmem [resolvable:$true] %s26
      %32 = dma.hbm_to_vmem [thread:$0]  %s1, 256, %s27, [#allocation5], 64, 64, 4
    $region9: #{tpu_custom_call.1} parent=1 // pred_fallthru
      _
    // Predicated region
    $region10: #{tpu_custom_call.1} parent=1 // pred_check
      _
    $region11: #{tpu_custom_call.1} parent=1 // pred_check_branch
      %34 = sbr.rel (0) target = $region13
    $region12: #{tpu_custom_call.1} parent=1 // pred_region
      %s36 = ssub.s32 3072, 3072
      %37 = vsyncadd [#allocation5], %s36
      %s38 = sshll.u32 [#allocation6], 4
      %s39 = int_to_ptr.vmem [resolvable:$true] %s38
      %44 = dma.hbm_to_vmem [thread:$0]  %s2, 3072, %s39, [#allocation5], 64, 64, 4
    $region13: #{tpu_custom_call.1} parent=1 // pred_fallthru
      _
    // Predicated region
    $region14: #{tpu_custom_call.1} parent=1 // pred_check
      _
    $region15: #{tpu_custom_call.1} parent=1 // pred_check_branch
      %46 = sbr.rel (0) target = $region17
    $region16: #{tpu_custom_call.1} parent=1 // pred_region
      _
    $region17: #{tpu_custom_call.1} parent=1 // pred_fallthru
      _
    // Predicated region
    $region18: #{tpu_custom_call.1} parent=1 // pred_check
      _
    $region19: #{tpu_custom_call.1} parent=1 // pred_check_branch
      %48 = sbr.rel (0) target = $region21
    $region20: #{tpu_custom_call.1} parent=1 // pred_region
      %49 = dma.done [#allocation3], 128
    $region21: #{tpu_custom_call.1} parent=1 // pred_fallthru
      _
    // Predicated region
    $region22: #{tpu_custom_call.1} parent=1 // pred_check
      _
    $region23: #{tpu_custom_call.1} parent=1 // pred_check_branch
      %51 = sbr.rel (0) target = $region25
    $region24: #{tpu_custom_call.1} parent=1 // pred_region
      %52 = dma.done [#allocation5], 256
    $region25: #{tpu_custom_call.1} parent=1 // pred_fallthru
      _
    // Predicated region
    $region26: #{tpu_custom_call.1} parent=1 // pred_check
      _
    $region27: #{tpu_custom_call.1} parent=1 // pred_check_branch
      %54 = sbr.rel (0) target = $region29
    $region28: #{tpu_custom_call.1} parent=1 // pred_region
      %55 = dma.done [#allocation5], 3072
    $region29: #{tpu_custom_call.1} parent=1 // pred_fallthru
      _
    %v57 = vld [vmem:[#allocation2] sm:$0xff]
    %v58 = vpack.c.bf16 %v57, %v57
    %v59 = vld [vmem:[#allocation4] sm:$0xf]
    %v60 = vld [vmem:[#allocation4 + $0x4] sm:$0xf]
    %v61 = vld [vmem:[#allocation4 + $0x8] sm:$0xf]
    %v62 = vld [vmem:[#allocation4 + $0xc] sm:$0xf]
    %v63 = vld [vmem:[%s3] sm:$0x1]
    %v65 = vlaneseq
    %v66 = vshrl.u32 %v65, 7
    %v67 = vsub.s32 0, %v66
    %v68 = vrot.slane %v63, %v67
    %v74 = vunpack.c.l.b16 %v59
    %v75 = vunpack.c.l.b16 %v60
    %v76 = vunpack.c.l.b16 %v61
    %v77 = vunpack.c.l.b16 %v62
    %v78 = vpack.c.b16 %v75, %v74
    %v79 = vpack.c.b16 %v77, %v76
    %vm82 = vcmask 261120
    %v84 = vsel %vm82, %v58, 0
    %86 = vmatprep.subr.bf16.mxu0 0
    %87 = vmatpush1.bf16.msra.mxu0 0
    %88 = vmatprep.subr.bf16.mxu0 0
    %89 = vmatpush1.bf16.msra.mxu0 0
    %90 = vmatprep.subr.bf16.mxu0 0
    %91 = vmatpush1.bf16.msra.mxu0 0
    %92 = vmatprep.subr.bf16.mxu0 0
    %93 = vmatpush1.bf16.msra.mxu0 0
    %94 = vmatprep.subr.bf16.mxu0 0
    %95 = vmatpush1.bf16.msra.mxu0 0
    %96 = vmatprep.subr.bf16.mxu0 0
    %97 = vmatpush1.bf16.msra.mxu0 0
    %98 = vmatprep.subr.bf16.mxu0 0
    %99 = vmatpush1.bf16.msra.mxu0 %v79
    %100 = vmatprep.subr.bf16.mxu0 0
    %101 = vmatpush1.bf16.msra.mxu0 %v78
    %102 = vmatprep.subr.bf16.mxu0 0
    %103 = vmatpush2.bf16.msra.mxu0 0
    %104 = vmatprep.subr.bf16.mxu0 0
    %105 = vmatpush2.bf16.msra.mxu0 0
    %106 = vmatprep.subr.bf16.mxu0 0
    %107 = vmatpush2.bf16.msra.mxu0 0
    %108 = vmatprep.subr.bf16.mxu0 0
    %109 = vmatpush2.bf16.msra.mxu0 0
    %110 = vmatprep.subr.bf16.mxu0 0
    %111 = vmatpush2.bf16.msra.mxu0 0
    %112 = vmatprep.subr.bf16.mxu0 0
    %113 = vmatpush2.bf16.msra.mxu0 0
    %114 = vmatprep.subr.bf16.mxu0 0
    %115 = vmatpush2.bf16.msra.mxu0 0
    %116 = vmatprep.subr.bf16.mxu0 0
    %117 = vmatpush2.bf16.msra.mxu0 0
    %118 = vmatprep.mubr.bf16.mxu0 0
    %119 = vmatmul.mubr.bf16.gmra.mxu0 %v84
    %v120 = vpop.f32.mrf.mxu0
    %v121 = vadd.f32 %v68, %v120
    %v122 = vpop.f32.mrf.mxu0
    %v123 = vpop.f32.mrf.mxu0
    %v124 = vpop.f32.mrf.mxu0
    %125 = vdwg.mxu0
    %v126 = vpack.c.bf16 %v121, %v121
    %v127 = vtanh.bf16.pop %v126
    %v128 = vld [vmem:[#allocation6] sm:$0xf]
    %v129 = vld [vmem:[#allocation6 + $0x4] sm:$0xf]
    %v130 = vld [vmem:[#allocation6 + $0x8] sm:$0xf]
    %v131 = vld [vmem:[#allocation6 + $0xc] sm:$0xf]
    %v132 = vld [vmem:[#allocation6 + $0x10] sm:$0xf]
    %v133 = vld [vmem:[#allocation6 + $0x14] sm:$0xf]
    %v134 = vld [vmem:[#allocation6 + $0x18] sm:$0xf]
    %v135 = vld [vmem:[#allocation6 + $0x1c] sm:$0xf]
    %v136 = vld [vmem:[#allocation6 + $0x20] sm:$0xf]
    %v137 = vld [vmem:[#allocation6 + $0x24] sm:$0xf]
    %v138 = vld [vmem:[#allocation6 + $0x28] sm:$0xf]
    %v139 = vld [vmem:[#allocation6 + $0x2c] sm:$0xf]
    %v140 = vld [vmem:[#allocation6 + $0x30] sm:$0xf]
    %v141 = vld [vmem:[#allocation6 + $0x34] sm:$0xf]
    %v142 = vld [vmem:[#allocation6 + $0x38] sm:$0xf]
    %v143 = vld [vmem:[#allocation6 + $0x3c] sm:$0xf]
    %s144 = scalar_lea.vmem %s3, 1
    %v145 = vld [vmem:[%s144] sm:$0x1]
    %v147 = vlaneseq
    %v148 = vshrl.u32 %v147, 7
    %v149 = vsub.s32 0, %v148
    %v150 = vrot.slane %v145, %v149
    %v168 = vunpack.c.l.b16 %v128
    %v169 = vunpack.c.l.b16 %v129
    %v170 = vunpack.c.l.b16 %v130
    %v171 = vunpack.c.l.b16 %v131
    %v172 = vunpack.c.l.b16 %v132
    %v173 = vunpack.c.l.b16 %v133
    %v174 = vunpack.c.l.b16 %v134
    %v175 = vunpack.c.l.b16 %v135
    %v176 = vunpack.c.l.b16 %v136
    %v177 = vunpack.c.l.b16 %v137
    %v178 = vunpack.c.l.b16 %v138
    %v179 = vunpack.c.l.b16 %v139
    %v180 = vunpack.c.l.b16 %v140
    %v181 = vunpack.c.l.b16 %v141
    %v182 = vunpack.c.l.b16 %v142
    %v183 = vunpack.c.l.b16 %v143
    %v184 = vpack.c.b16 %v169, %v168
    %v185 = vpack.c.b16 %v171, %v170
    %v186 = vpack.c.b16 %v173, %v172
    %v187 = vpack.c.b16 %v175, %v174
    %v188 = vpack.c.b16 %v177, %v176
    %v189 = vpack.c.b16 %v179, %v178
    %v190 = vpack.c.b16 %v181, %v180
    %v191 = vpack.c.b16 %v183, %v182
    %200 = vmatprep.subr.bf16.mxu0 0
    %201 = vmatpush1.bf16.msra.mxu0 %v191
    %202 = vmatprep.subr.bf16.mxu0 0
    %203 = vmatpush1.bf16.msra.mxu0 %v190
    %204 = vmatprep.subr.bf16.mxu0 0
    %205 = vmatpush1.bf16.msra.mxu0 %v189
    %206 = vmatprep.subr.bf16.mxu0 0
    %207 = vmatpush1.bf16.msra.mxu0 %v188
    %208 = vmatprep.subr.bf16.mxu0 0
    %209 = vmatpush1.bf16.msra.mxu0 %v187
    %210 = vmatprep.subr.bf16.mxu0 0
    %211 = vmatpush1.bf16.msra.mxu0 %v186
    %212 = vmatprep.subr.bf16.mxu0 0
    %213 = vmatpush1.bf16.msra.mxu0 %v185
    %214 = vmatprep.subr.bf16.mxu0 0
    %215 = vmatpush1.bf16.msra.mxu0 %v184
    %216 = vmatprep.subr.bf16.mxu0 0
    %217 = vmatpush2.bf16.msra.mxu0 0
    %218 = vmatprep.subr.bf16.mxu0 0
    %219 = vmatpush2.bf16.msra.mxu0 0
    %220 = vmatprep.subr.bf16.mxu0 0
    %221 = vmatpush2.bf16.msra.mxu0 0
    %222 = vmatprep.subr.bf16.mxu0 0
    %223 = vmatpush2.bf16.msra.mxu0 0
    %224 = vmatprep.subr.bf16.mxu0 0
    %225 = vmatpush2.bf16.msra.mxu0 0
    %226 = vmatprep.subr.bf16.mxu0 0
    %227 = vmatpush2.bf16.msra.mxu0 0
    %228 = vmatprep.subr.bf16.mxu0 0
    %229 = vmatpush2.bf16.msra.mxu0 0
    %230 = vmatprep.subr.bf16.mxu0 0
    %231 = vmatpush2.bf16.msra.mxu0 0
    %232 = vmatprep.mubr.bf16.mxu0 0
    %233 = vmatmul.mubr.bf16.gmra.mxu0 %v127
    %v234 = vpop.f32.mrf.mxu0
    %v235 = vadd.f32 %v150, %v234
    %v236 = vpop.f32.mrf.mxu0
    %v237 = vpop.f32.mrf.mxu0
    %v238 = vpop.f32.mrf.mxu0
    %239 = vdwg.mxu0
    %v240 = vpack.c.bf16 %v235, %v235
    %v241 = vtanh.bf16.pop %v240
    %s242 = scalar_lea.vmem [#allocation6], 64
    %v243 = vld [vmem:[%s242] sm:$0xf]
    %v244 = vld [vmem:[%s242 + $0x4] sm:$0xf]
    %v245 = vld [vmem:[%s242 + $0x8] sm:$0xf]
    %v246 = vld [vmem:[%s242 + $0xc] sm:$0xf]
    %v247 = vld [vmem:[%s242 + $0x10] sm:$0xf]
    %v248 = vld [vmem:[%s242 + $0x14] sm:$0xf]
    %v249 = vld [vmem:[%s242 + $0x18] sm:$0xf]
    %v250 = vld [vmem:[%s242 + $0x1c] sm:$0xf]
    %v251 = vld [vmem:[%s242 + $0x20] sm:$0xf]
    %v252 = vld [vmem:[%s242 + $0x24] sm:$0xf]
    %v253 = vld [vmem:[%s242 + $0x28] sm:$0xf]
    %v254 = vld [vmem:[%s242 + $0x2c] sm:$0xf]
    %v255 = vld [vmem:[%s242 + $0x30] sm:$0xf]
    %v256 = vld [vmem:[%s242 + $0x34] sm:$0xf]
    %v257 = vld [vmem:[%s242 + $0x38] sm:$0xf]
    %v258 = vld [vmem:[%s242 + $0x3c] sm:$0xf]
    %s259 = scalar_lea.vmem %s3, 2
    %v260 = vld [vmem:[%s259] sm:$0x1]
    %v262 = vlaneseq
    %v263 = vshrl.u32 %v262, 7
    %v264 = vsub.s32 0, %v263
    %v265 = vrot.slane %v260, %v264
    %v283 = vunpack.c.l.b16 %v243
    %v284 = vunpack.c.l.b16 %v244
    %v285 = vunpack.c.l.b16 %v245
    %v286 = vunpack.c.l.b16 %v246
    %v287 = vunpack.c.l.b16 %v247
    %v288 = vunpack.c.l.b16 %v248
    %v289 = vunpack.c.l.b16 %v249
    %v290 = vunpack.c.l.b16 %v250
    %v291 = vunpack.c.l.b16 %v251
    %v292 = vunpack.c.l.b16 %v252
    %v293 = vunpack.c.l.b16 %v253
    %v294 = vunpack.c.l.b16 %v254
    %v295 = vunpack.c.l.b16 %v255
    %v296 = vunpack.c.l.b16 %v256
    %v297 = vunpack.c.l.b16 %v257
    %v298 = vunpack.c.l.b16 %v258
    %v299 = vpack.c.b16 %v284, %v283
    %v300 = vpack.c.b16 %v286, %v285
    %v301 = vpack.c.b16 %v288, %v287
    %v302 = vpack.c.b16 %v290, %v289
    %v303 = vpack.c.b16 %v292, %v291
    %v304 = vpack.c.b16 %v294, %v293
    %v305 = vpack.c.b16 %v296, %v295
    %v306 = vpack.c.b16 %v298, %v297
    %315 = vmatprep.subr.bf16.mxu0 0
    %316 = vmatpush1.bf16.msra.mxu0 %v306
    %317 = vmatprep.subr.bf16.mxu0 0
    %318 = vmatpush1.bf16.msra.mxu0 %v305
    %319 = vmatprep.subr.bf16.mxu0 0
    %320 = vmatpush1.bf16.msra.mxu0 %v304
    %321 = vmatprep.subr.bf16.mxu0 0
    %322 = vmatpush1.bf16.msra.mxu0 %v303
    %323 = vmatprep.subr.bf16.mxu0 0
    %324 = vmatpush1.bf16.msra.mxu0 %v302
    %325 = vmatprep.subr.bf16.mxu0 0
    %326 = vmatpush1.bf16.msra.mxu0 %v301
    %327 = vmatprep.subr.bf16.mxu0 0
    %328 = vmatpush1.bf16.msra.mxu0 %v300
    %329 = vmatprep.subr.bf16.mxu0 0
    %330 = vmatpush1.bf16.msra.mxu0 %v299
    %331 = vmatprep.subr.bf16.mxu0 0
    %332 = vmatpush2.bf16.msra.mxu0 0
    %333 = vmatprep.subr.bf16.mxu0 0
    %334 = vmatpush2.bf16.msra.mxu0 0
    %335 = vmatprep.subr.bf16.mxu0 0
    %336 = vmatpush2.bf16.msra.mxu0 0
    %337 = vmatprep.subr.bf16.mxu0 0
    %338 = vmatpush2.bf16.msra.mxu0 0
    %339 = vmatprep.subr.bf16.mxu0 0
    %340 = vmatpush2.bf16.msra.mxu0 0
    %341 = vmatprep.subr.bf16.mxu0 0
    %342 = vmatpush2.bf16.msra.mxu0 0
    %343 = vmatprep.subr.bf16.mxu0 0
    %344 = vmatpush2.bf16.msra.mxu0 0
    %345 = vmatprep.subr.bf16.mxu0 0
    %346 = vmatpush2.bf16.msra.mxu0 0
    %347 = vmatprep.mubr.bf16.mxu0 0
    %348 = vmatmul.mubr.bf16.gmra.mxu0 %v241
    %v349 = vpop.f32.mrf.mxu0
    %v350 = vadd.f32 %v265, %v349
    %v351 = vpop.f32.mrf.mxu0
    %v352 = vpop.f32.mrf.mxu0
    %v353 = vpop.f32.mrf.mxu0
    %354 = vdwg.mxu0
    %v355 = vpack.c.bf16 %v350, %v350
    %v356 = vtanh.bf16.pop %v355
    %s357 = scalar_lea.vmem [#allocation6], 128
    %v358 = vld [vmem:[%s357] sm:$0xf]
    %v359 = vld [vmem:[%s357 + $0x4] sm:$0xf]
    %v360 = vld [vmem:[%s357 + $0x8] sm:$0xf]
    %v361 = vld [vmem:[%s357 + $0xc] sm:$0xf]
    %v362 = vld [vmem:[%s357 + $0x10] sm:$0xf]
    %v363 = vld [vmem:[%s357 + $0x14] sm:$0xf]
    %v364 = vld [vmem:[%s357 + $0x18] sm:$0xf]
    %v365 = vld [vmem:[%s357 + $0x1c] sm:$0xf]
    %v366 = vld [vmem:[%s357 + $0x20] sm:$0xf]
    %v367 = vld [vmem:[%s357 + $0x24] sm:$0xf]
    %v368 = vld [vmem:[%s357 + $0x28] sm:$0xf]
    %v369 = vld [vmem:[%s357 + $0x2c] sm:$0xf]
    %v370 = vld [vmem:[%s357 + $0x30] sm:$0xf]
    %v371 = vld [vmem:[%s357 + $0x34] sm:$0xf]
    %v372 = vld [vmem:[%s357 + $0x38] sm:$0xf]
    %v373 = vld [vmem:[%s357 + $0x3c] sm:$0xf]
    %s374 = scalar_lea.vmem %s3, 3
    %v375 = vld [vmem:[%s374] sm:$0x1]
    %v377 = vlaneseq
    %v378 = vshrl.u32 %v377, 7
    %v379 = vsub.s32 0, %v378
    %v380 = vrot.slane %v375, %v379
    %v398 = vunpack.c.l.b16 %v358
    %v399 = vunpack.c.l.b16 %v359
    %v400 = vunpack.c.l.b16 %v360
    %v401 = vunpack.c.l.b16 %v361
    %v402 = vunpack.c.l.b16 %v362
    %v403 = vunpack.c.l.b16 %v363
    %v404 = vunpack.c.l.b16 %v364
    %v405 = vunpack.c.l.b16 %v365
    %v406 = vunpack.c.l.b16 %v366
    %v407 = vunpack.c.l.b16 %v367
    %v408 = vunpack.c.l.b16 %v368
    %v409 = vunpack.c.l.b16 %v369
    %v410 = vunpack.c.l.b16 %v370
    %v411 = vunpack.c.l.b16 %v371
    %v412 = vunpack.c.l.b16 %v372
    %v413 = vunpack.c.l.b16 %v373
    %v414 = vpack.c.b16 %v399, %v398
    %v415 = vpack.c.b16 %v401, %v400
    %v416 = vpack.c.b16 %v403, %v402
    %v417 = vpack.c.b16 %v405, %v404
    %v418 = vpack.c.b16 %v407, %v406
    %v419 = vpack.c.b16 %v409, %v408
    %v420 = vpack.c.b16 %v411, %v410
    %v421 = vpack.c.b16 %v413, %v412
    %430 = vmatprep.subr.bf16.mxu0 0
    %431 = vmatpush1.bf16.msra.mxu0 %v421
    %432 = vmatprep.subr.bf16.mxu0 0
    %433 = vmatpush1.bf16.msra.mxu0 %v420
    %434 = vmatprep.subr.bf16.mxu0 0
    %435 = vmatpush1.bf16.msra.mxu0 %v419
    %436 = vmatprep.subr.bf16.mxu0 0
    %437 = vmatpush1.bf16.msra.mxu0 %v418
    %438 = vmatprep.subr.bf16.mxu0 0
    %439 = vmatpush1.bf16.msra.mxu0 %v417
    %440 = vmatprep.subr.bf16.mxu0 0
    %441 = vmatpush1.bf16.msra.mxu0 %v416
    %442 = vmatprep.subr.bf16.mxu0 0
    %443 = vmatpush1.bf16.msra.mxu0 %v415
    %444 = vmatprep.subr.bf16.mxu0 0
    %445 = vmatpush1.bf16.msra.mxu0 %v414
    %446 = vmatprep.subr.bf16.mxu0 0
    %447 = vmatpush2.bf16.msra.mxu0 0
    %448 = vmatprep.subr.bf16.mxu0 0
    %449 = vmatpush2.bf16.msra.mxu0 0
    %450 = vmatprep.subr.bf16.mxu0 0
    %451 = vmatpush2.bf16.msra.mxu0 0
    %452 = vmatprep.subr.bf16.mxu0 0
    %453 = vmatpush2.bf16.msra.mxu0 0
    %454 = vmatprep.subr.bf16.mxu0 0
    %455 = vmatpush2.bf16.msra.mxu0 0
    %456 = vmatprep.subr.bf16.mxu0 0
    %457 = vmatpush2.bf16.msra.mxu0 0
    %458 = vmatprep.subr.bf16.mxu0 0
    %459 = vmatpush2.bf16.msra.mxu0 0
    %460 = vmatprep.subr.bf16.mxu0 0
    %461 = vmatpush2.bf16.msra.mxu0 0
    %462 = vmatprep.mubr.bf16.mxu0 0
    %463 = vmatmul.mubr.bf16.gmra.mxu0 %v356
    %v464 = vpop.f32.mrf.mxu0
    %v465 = vadd.f32 %v380, %v464
    %v466 = vpop.f32.mrf.mxu0
    %v467 = vpop.f32.mrf.mxu0
    %v468 = vpop.f32.mrf.mxu0
    %469 = vdwg.mxu0
    %vm470 = vcmask 15360
    %471 = vst.msk [vmem:[%s4] sm:$0xff] %vm470, %v465
    // Predicated region
    $region30: #{tpu_custom_call.1} parent=1 // pred_check
      _
    $region31: #{tpu_custom_call.1} parent=1 // pred_check_branch
      %473 = sbr.rel (0) target = $region33
    $region32: #{tpu_custom_call.1} parent=1 // pred_region
      _
    $region33: #{tpu_custom_call.1} parent=1 // pred_fallthru
      _
    // Predicated region
    $region34: #{tpu_custom_call.1} parent=1 // pred_check
      _
    $region35: #{tpu_custom_call.1} parent=1 // pred_check_branch
      %475 = sbr.rel (0) target = $region37
    $region36: #{tpu_custom_call.1} parent=1 // pred_region
      _
    $region37: #{tpu_custom_call.1} parent=1 // pred_fallthru
      _
    %476 = vsyncpa [#allocation3], 1
    %477 = vsyncpa [#allocation5], 1

</llo_original>
